<compile_context>
chip_gen: v7x
topology: tpu7x:2x2x1
jax: 0.10.0
libtpu: 0.0.40
codegen_flags: <defaults>
</compile_context>

<pallas_src>
import functools

import jax
import jax.numpy as jnp
from jax import lax
from jax.experimental import pallas as pl
from jax.experimental.pallas import tpu as pltpu


def _gru_classifier_kernel(x_ref, wg_ref, b_ref, wout_ref, onehot_ref, loss_ref,
                           *, T, B, BP, D, H, C):
    # x_ref:      (T*BP, D)  time-major features, batch padded to BP rows/step, bf16
    # wg_ref:     (D+H, HP)  rows 0:D = fused W_ih [r|z|n|0], rows D:D+H = fused W_hh, bf16
    # b_ref:      (3, HP)    row0 = b_gi (b_ir+b_hr | b_iz+b_hz | b_in | 0),
    #                        row1 = b_gh (0 | 0 | b_hn | 0), row2 = b_out (lane-padded), f32
    # wout_ref:   (H, C)     output Linear weight (pre-transposed), bf16
    # onehot_ref: (BP, C)    one-hot labels, padded rows zero, f32
    # loss_ref:   (1, 1)     scalar loss (SMEM)

    # Loop-invariant loads.
    w_ih = wg_ref[0:D, :]                                       # (D, HP) bf16
    w_hh = wg_ref[D:D + H, :]                                   # (H, HP) bf16
    b_gi = b_ref[0:1, :]                                        # (1, HP) f32
    b_gh = b_ref[1:2, :]                                        # (1, HP) f32

    # Input projections for ALL timesteps: one matmul, off the serial chain.
    gi_all = (jnp.dot(x_ref[...], w_ih,
                      preferred_element_type=jnp.float32)
              + b_gi)                                           # (T*BP, HP) f32

    h = jnp.zeros((BP, H), dtype=jnp.float32)
    # Fully unrolled recurrence: only the fused h @ W_hh matmul (bf16 in, f32 acc),
    # one fused sigmoid pass and one tanh pass sit on the serial dependence chain.
    for t in range(T):
        gi = gi_all[t * BP:(t + 1) * BP, :]                     # one (8,128) sublane tile
        gh = (jnp.dot(h.astype(jnp.bfloat16), w_hh,
                      preferred_element_type=jnp.float32)
              + b_gh)                                           # (BP, HP) f32
        # Fused r/z: a single EUP sigmoid over the 2H-lane block per step.
        rz = jax.nn.sigmoid(gi[:, 0:2 * H] + gh[:, 0:2 * H])
        r = rz[:, 0:H]
        z = rz[:, H:2 * H]
        n = jnp.tanh(gi[:, 2 * H:3 * H] + r * gh[:, 2 * H:3 * H])
        h = (1.0 - z) * n + z * h                               # f32 carry

    # logits = self.out(hidden)
    logits = (jnp.dot(h.astype(jnp.bfloat16), wout_ref[...],
                      preferred_element_type=jnp.float32)
              + b_ref[2:3, 0:C])                                # (BP, C) f32

    # result = LogSoftmax(logits)
    m1 = jnp.max(logits, axis=-1, keepdims=True)
    lse1 = jnp.log(jnp.sum(jnp.exp(logits - m1), axis=-1, keepdims=True)) + m1
    result = logits - lse1

    # CrossEntropyLoss(result, labels): its internal log-softmax of an already
    # log-softmaxed input is exactly the identity (sum(exp(result)) == 1), so it
    # is dropped. Mean-reduced NLL over the REAL batch; padded one-hot rows are zero.
    loss_ref[0, 0] = -jnp.sum(onehot_ref[...] * result) * (1.0 / B)


def pack_example_classifier_params(params):
    """Repack PyTorch-layout GRU/Linear params into the kernel layout.

    Call ONCE per parameter set (not per forward): this is wrapper-side XLA work
    that would otherwise dominate a microsecond-scale kernel.
    """
    w_ih, w_hh = params["weight_ih"], params["weight_hh"]     # (3H, D), (3H, H)
    b_ih, b_hh = params["bias_ih"], params["bias_hh"]         # (3H,), (3H,)
    w_out, b_out = params["out_weight"], params["out_bias"]   # (C, H), (C,)
    H = w_hh.shape[1]
    D = w_ih.shape[1]
    C = w_out.shape[0]
    HP = ((3 * H + 127) // 128) * 128   # pad fused gate/lane axis to full vregs

    # Fused, pre-transposed, zero-padded gate weights (gate order [r, z, n]),
    # concatenated into one bf16 slab: rows 0:D -> W_ih, rows D:D+H -> W_hh.
    wih_f = jnp.moveaxis(w_ih.reshape(3, H, D), -1, 0).reshape(D, 3 * H)
    whh_f = jnp.moveaxis(w_hh.reshape(3, H, H), -1, 0).reshape(H, 3 * H)
    wih_f = jnp.pad(wih_f, ((0, 0), (0, HP - 3 * H)))
    whh_f = jnp.pad(whh_f, ((0, 0), (0, HP - 3 * H)))
    w_gates = jnp.concatenate([wih_f, whh_f], axis=0).astype(jnp.bfloat16)  # (D+H, HP)

    # Pre-folded biases: r/z hidden biases folded into the input-side bias; only
    # b_hn stays on the per-step path (inside r * (...)).  Output bias as row 2.
    b_ih3 = b_ih.reshape(3, H).astype(jnp.float32)
    b_hh3 = b_hh.reshape(3, H).astype(jnp.float32)
    b_gi = jnp.concatenate([b_ih3[0] + b_hh3[0], b_ih3[1] + b_hh3[1], b_ih3[2]])
    b_gh = jnp.concatenate([jnp.zeros((2 * H,), jnp.float32), b_hh3[2]])
    b_all = jnp.stack([jnp.pad(b_gi, (0, HP - 3 * H)),
                       jnp.pad(b_gh, (0, HP - 3 * H)),
                       jnp.pad(b_out.astype(jnp.float32), (0, HP - C))])     # (3, HP)

    wout_t = w_out.T.astype(jnp.bfloat16)                                    # (H, C)
    return {"w_gates": w_gates, "b_all": b_all, "wout_t": wout_t,
            "dims": (D, H, C, HP)}


def example_classifier_loss(features, labels, packed):
    """features: (B, T, D) float32 (batch_first, like PyTorch); labels: (B,) int32."""
    B, T, D = features.shape
    D_p, H, C, HP = packed["dims"]
    assert D == D_p
    BP = ((B + 7) // 8) * 8   # pad batch to the 8-sublane tile

    # Time-major, batch padded to BP rows per step, flattened so each step's gi
    # slice is exactly one sublane-aligned (8, lanes) tile. Padded rows are zero,
    # stay bounded through sigmoid/tanh, and never contribute to the loss.
    x_tm = jnp.transpose(features, (1, 0, 2))                  # (T, B, D)
    x_tm = jnp.pad(x_tm, ((0, 0), (0, BP - B), (0, 0)))
    x_flat = x_tm.reshape(T * BP, D).astype(jnp.bfloat16)

    onehot = jax.nn.one_hot(labels, C, dtype=jnp.float32)      # (B, C)
    onehot = jnp.pad(onehot, ((0, BP - B), (0, 0)))            # padded rows zero

    kernel = functools.partial(_gru_classifier_kernel,
                               T=T, B=B, BP=BP, D=D, H=H, C=C)
    # TODO(synk): for large B/T add a batch grid axis with
    # dimension_semantics=("parallel",) (uses both v7x TensorCores) and size tiles
    # against the v7x 64 MiB VMEM budget rather than v5e/v6e's 128 MiB.
    loss = pl.pallas_call(
        kernel,
        out_shape=jax.ShapeDtypeStruct((1, 1), jnp.float32),
        in_specs=[pl.BlockSpec(memory_space=pltpu.MemorySpace.VMEM)] * 5,
        out_specs=pl.BlockSpec(memory_space=pltpu.MemorySpace.SMEM),
    )(x_flat, packed["w_gates"], packed["b_all"], packed["wout_t"], onehot)
    return loss[0, 0]


def _reference_loss(features, labels, params):
    """Pure-JAX f32 reference mirroring the PyTorch forward (incl. the double
    log-softmax) for a sanity check."""
    w_ih, w_hh = params["weight_ih"], params["weight_hh"]
    b_ih, b_hh = params["bias_ih"], params["bias_hh"]
    w_out, b_out = params["out_weight"], params["out_bias"]
    H = w_hh.shape[1]
    B, T, D = features.shape

    def cell(h, x_t):
        gi = x_t @ w_ih.T + b_ih
        gh = h @ w_hh.T + b_hh
        r = jax.nn.sigmoid(gi[:, :H] + gh[:, :H])
        z = jax.nn.sigmoid(gi[:, H:2 * H] + gh[:, H:2 * H])
        n = jnp.tanh(gi[:, 2 * H:] + r * gh[:, 2 * H:])
        return (1.0 - z) * n + z * h, None

    h, _ = lax.scan(cell, jnp.zeros((B, H), jnp.float32),
                    jnp.transpose(features, (1, 0, 2)))
    logits = h @ w_out.T + b_out
    result = jax.nn.log_softmax(logits, axis=-1)
    logp = jax.nn.log_softmax(result, axis=-1)
    return -jnp.mean(logp[jnp.arange(B), labels])


if __name__ == "__main__":
    B, T, D, H, C = 2, 8, 16, 32, 4

    key = jax.random.PRNGKey(0)
    k_feat, k_lab, k_wih, k_whh, k_bih, k_bhh, k_wo, k_bo = jax.random.split(key, 8)

    features = jax.random.normal(k_feat, (B, T, D), dtype=jnp.float32)
    labels = jax.random.randint(k_lab, (B,), 0, C, dtype=jnp.int32)

    # Deterministic parameter init, PyTorch-style U(-1/sqrt(H), 1/sqrt(H)).
    s = 1.0 / jnp.sqrt(H)
    params = {
        "weight_ih": jax.random.uniform(k_wih, (3 * H, D), jnp.float32, -s, s),
        "weight_hh": jax.random.uniform(k_whh, (3 * H, H), jnp.float32, -s, s),
        "bias_ih": jax.random.uniform(k_bih, (3 * H,), jnp.float32, -s, s),
        "bias_hh": jax.random.uniform(k_bhh, (3 * H,), jnp.float32, -s, s),
        "out_weight": jax.random.uniform(k_wo, (C, H), jnp.float32, -s, s),
        "out_bias": jax.random.uniform(k_bo, (C,), jnp.float32, -s, s),
    }

    # Pack parameters once (hoisted off the per-call path).
    packed = pack_example_classifier_params(params)

    loss = example_classifier_loss(features, labels, packed)
    jax.block_until_ready(loss)

    ref = _reference_loss(features, labels, params)
    # bf16 MXU inputs (f32 accumulation) vs pure-f32 reference -> loose tolerance.
    assert jnp.allclose(loss, ref, rtol=2e-2, atol=2e-2), (loss, ref)

    print("KERNEL_OK")
</pallas_src>

<mosaic_0001>
module attributes {stable_mosaic.version = 11 : i64} {
  func.func @_gru_classifier_kernel(%arg0: memref<64x16xbf16, #tpu.memory_space<vmem>>, %arg1: memref<48x128xbf16, #tpu.memory_space<vmem>>, %arg2: memref<3x128xf32, #tpu.memory_space<vmem>>, %arg3: memref<32x4xbf16, #tpu.memory_space<vmem>>, %arg4: memref<8x4xf32, #tpu.memory_space<vmem>>, %arg5: memref<1x1xf32, #tpu.memory_space<smem>>) attributes {dimension_semantics = [], scalar_prefetch = 0 : i64, scratch_operands = 0 : i64, tpu.core_type = #tpu.core_type<tc>} {
    %c0 = arith.constant 0 : index
    %c0_0 = arith.constant 0 : index
    %0 = vector.load %arg1[%c0, %c0_0] : memref<48x128xbf16, #tpu.memory_space<vmem>>, vector<16x128xbf16>
    %c16 = arith.constant 16 : index
    %c0_1 = arith.constant 0 : index
    %1 = vector.load %arg1[%c16, %c0_1] : memref<48x128xbf16, #tpu.memory_space<vmem>>, vector<32x128xbf16>
    %c0_2 = arith.constant 0 : index
    %c0_3 = arith.constant 0 : index
    %2 = vector.load %arg2[%c0_2, %c0_3] : memref<3x128xf32, #tpu.memory_space<vmem>>, vector<1x128xf32>
    %c1 = arith.constant 1 : index
    %c0_4 = arith.constant 0 : index
    %3 = vector.load %arg2[%c1, %c0_4] : memref<3x128xf32, #tpu.memory_space<vmem>>, vector<1x128xf32>
    %c0_5 = arith.constant 0 : index
    %c0_6 = arith.constant 0 : index
    %4 = vector.load %arg0[%c0_5, %c0_6] : memref<64x16xbf16, #tpu.memory_space<vmem>>, vector<64x16xbf16>
    %cst = arith.constant dense<0.000000e+00> : vector<64x128xf32>
    %5 = tpu.matmul %4, %0, %cst {dimension_numbers = #tpu.dot_dimension_numbers<[1], [0], [0], [1], [0, 0, 1, 1], [], []>} : vector<64x16xbf16>, vector<16x128xbf16>, vector<64x128xf32> -> vector<64x128xf32>
    %6 = vector.broadcast %2 : vector<1x128xf32> to vector<64x128xf32>
    %7 = arith.addf %5, %6 : vector<64x128xf32>
    %cst_7 = arith.constant 0.000000e+00 : f32
    %8 = vector.broadcast %cst_7 : f32 to vector<8x32xf32>
    %9 = vector.extract_strided_slice %7 {offsets = [0, 0], sizes = [8, 128], strides = [1, 1]} : vector<64x128xf32> to vector<8x128xf32>
    %10 = arith.truncf %8 : vector<8x32xf32> to vector<8x32xbf16>
    %cst_8 = arith.constant dense<0.000000e+00> : vector<8x128xf32>
    %11 = tpu.matmul %10, %1, %cst_8 {dimension_numbers = #tpu.dot_dimension_numbers<[1], [0], [0], [1], [0, 0, 1, 1], [], []>} : vector<8x32xbf16>, vector<32x128xbf16>, vector<8x128xf32> -> vector<8x128xf32>
    %12 = vector.broadcast %3 : vector<1x128xf32> to vector<8x128xf32>
    %13 = arith.addf %11, %12 : vector<8x128xf32>
    %14 = vector.extract_strided_slice %9 {offsets = [0, 0], sizes = [8, 64], strides = [1, 1]} : vector<8x128xf32> to vector<8x64xf32>
    %15 = vector.extract_strided_slice %13 {offsets = [0, 0], sizes = [8, 64], strides = [1, 1]} : vector<8x128xf32> to vector<8x64xf32>
    %16 = arith.addf %14, %15 : vector<8x64xf32>
    %17 = arith.negf %16 : vector<8x64xf32>
    %18 = math.exp %17 : vector<8x64xf32>
    %cst_9 = arith.constant 1.000000e+00 : f32
    %19 = vector.broadcast %cst_9 : f32 to vector<8x64xf32>
    %20 = arith.addf %19, %18 : vector<8x64xf32>
    %21 = arith.divf %19, %20 : vector<8x64xf32>
    %22 = vector.extract_strided_slice %21 {offsets = [0, 0], sizes = [8, 32], strides = [1, 1]} : vector<8x64xf32> to vector<8x32xf32>
    %23 = vector.extract_strided_slice %21 {offsets = [0, 32], sizes = [8, 32], strides = [1, 1]} : vector<8x64xf32> to vector<8x32xf32>
    %24 = vector.extract_strided_slice %9 {offsets = [0, 64], sizes = [8, 32], strides = [1, 1]} : vector<8x128xf32> to vector<8x32xf32>
    %25 = vector.extract_strided_slice %13 {offsets = [0, 64], sizes = [8, 32], strides = [1, 1]} : vector<8x128xf32> to vector<8x32xf32>
    %26 = arith.mulf %22, %25 : vector<8x32xf32>
    %27 = arith.addf %24, %26 : vector<8x32xf32>
    %28 = math.tanh %27 : vector<8x32xf32>
    %cst_10 = arith.constant 1.000000e+00 : f32
    %29 = vector.broadcast %cst_10 : f32 to vector<8x32xf32>
    %30 = arith.subf %29, %23 : vector<8x32xf32>
    %31 = arith.mulf %30, %28 : vector<8x32xf32>
    %32 = arith.mulf %23, %8 : vector<8x32xf32>
    %33 = arith.addf %31, %32 : vector<8x32xf32>
    %34 = vector.extract_strided_slice %7 {offsets = [8, 0], sizes = [8, 128], strides = [1, 1]} : vector<64x128xf32> to vector<8x128xf32>
    %35 = arith.truncf %33 : vector<8x32xf32> to vector<8x32xbf16>
    %cst_11 = arith.constant dense<0.000000e+00> : vector<8x128xf32>
    %36 = tpu.matmul %35, %1, %cst_11 {dimension_numbers = #tpu.dot_dimension_numbers<[1], [0], [0], [1], [0, 0, 1, 1], [], []>} : vector<8x32xbf16>, vector<32x128xbf16>, vector<8x128xf32> -> vector<8x128xf32>
    %37 = vector.broadcast %3 : vector<1x128xf32> to vector<8x128xf32>
    %38 = arith.addf %36, %37 : vector<8x128xf32>
    %39 = vector.extract_strided_slice %34 {offsets = [0, 0], sizes = [8, 64], strides = [1, 1]} : vector<8x128xf32> to vector<8x64xf32>
    %40 = vector.extract_strided_slice %38 {offsets = [0, 0], sizes = [8, 64], strides = [1, 1]} : vector<8x128xf32> to vector<8x64xf32>
    %41 = arith.addf %39, %40 : vector<8x64xf32>
    %42 = arith.negf %41 : vector<8x64xf32>
    %43 = math.exp %42 : vector<8x64xf32>
    %cst_12 = arith.constant 1.000000e+00 : f32
    %44 = vector.broadcast %cst_12 : f32 to vector<8x64xf32>
    %45 = arith.addf %44, %43 : vector<8x64xf32>
    %46 = arith.divf %44, %45 : vector<8x64xf32>
    %47 = vector.extract_strided_slice %46 {offsets = [0, 0], sizes = [8, 32], strides = [1, 1]} : vector<8x64xf32> to vector<8x32xf32>
    %48 = vector.extract_strided_slice %46 {offsets = [0, 32], sizes = [8, 32], strides = [1, 1]} : vector<8x64xf32> to vector<8x32xf32>
    %49 = vector.extract_strided_slice %34 {offsets = [0, 64], sizes = [8, 32], strides = [1, 1]} : vector<8x128xf32> to vector<8x32xf32>
    %50 = vector.extract_strided_slice %38 {offsets = [0, 64], sizes = [8, 32], strides = [1, 1]} : vector<8x128xf32> to vector<8x32xf32>
    %51 = arith.mulf %47, %50 : vector<8x32xf32>
    %52 = arith.addf %49, %51 : vector<8x32xf32>
    %53 = math.tanh %52 : vector<8x32xf32>
    %cst_13 = arith.constant 1.000000e+00 : f32
    %54 = vector.broadcast %cst_13 : f32 to vector<8x32xf32>
    %55 = arith.subf %54, %48 : vector<8x32xf32>
    %56 = arith.mulf %55, %53 : vector<8x32xf32>
    %57 = arith.mulf %48, %33 : vector<8x32xf32>
    %58 = arith.addf %56, %57 : vector<8x32xf32>
    %59 = vector.extract_strided_slice %7 {offsets = [16, 0], sizes = [8, 128], strides = [1, 1]} : vector<64x128xf32> to vector<8x128xf32>
    %60 = arith.truncf %58 : vector<8x32xf32> to vector<8x32xbf16>
    %cst_14 = arith.constant dense<0.000000e+00> : vector<8x128xf32>
    %61 = tpu.matmul %60, %1, %cst_14 {dimension_numbers = #tpu.dot_dimension_numbers<[1], [0], [0], [1], [0, 0, 1, 1], [], []>} : vector<8x32xbf16>, vector<32x128xbf16>, vector<8x128xf32> -> vector<8x128xf32>
    %62 = vector.broadcast %3 : vector<1x128xf32> to vector<8x128xf32>
    %63 = arith.addf %61, %62 : vector<8x128xf32>
    %64 = vector.extract_strided_slice %59 {offsets = [0, 0], sizes = [8, 64], strides = [1, 1]} : vector<8x128xf32> to vector<8x64xf32>
    %65 = vector.extract_strided_slice %63 {offsets = [0, 0], sizes = [8, 64], strides = [1, 1]} : vector<8x128xf32> to vector<8x64xf32>
    %66 = arith.addf %64, %65 : vector<8x64xf32>
    %67 = arith.negf %66 : vector<8x64xf32>
    %68 = math.exp %67 : vector<8x64xf32>
    %cst_15 = arith.constant 1.000000e+00 : f32
    %69 = vector.broadcast %cst_15 : f32 to vector<8x64xf32>
    %70 = arith.addf %69, %68 : vector<8x64xf32>
    %71 = arith.divf %69, %70 : vector<8x64xf32>
    %72 = vector.extract_strided_slice %71 {offsets = [0, 0], sizes = [8, 32], strides = [1, 1]} : vector<8x64xf32> to vector<8x32xf32>
    %73 = vector.extract_strided_slice %71 {offsets = [0, 32], sizes = [8, 32], strides = [1, 1]} : vector<8x64xf32> to vector<8x32xf32>
    %74 = vector.extract_strided_slice %59 {offsets = [0, 64], sizes = [8, 32], strides = [1, 1]} : vector<8x128xf32> to vector<8x32xf32>
    %75 = vector.extract_strided_slice %63 {offsets = [0, 64], sizes = [8, 32], strides = [1, 1]} : vector<8x128xf32> to vector<8x32xf32>
    %76 = arith.mulf %72, %75 : vector<8x32xf32>
    %77 = arith.addf %74, %76 : vector<8x32xf32>
    %78 = math.tanh %77 : vector<8x32xf32>
    %cst_16 = arith.constant 1.000000e+00 : f32
    %79 = vector.broadcast %cst_16 : f32 to vector<8x32xf32>
    %80 = arith.subf %79, %73 : vector<8x32xf32>
    %81 = arith.mulf %80, %78 : vector<8x32xf32>
    %82 = arith.mulf %73, %58 : vector<8x32xf32>
    %83 = arith.addf %81, %82 : vector<8x32xf32>
    %84 = vector.extract_strided_slice %7 {offsets = [24, 0], sizes = [8, 128], strides = [1, 1]} : vector<64x128xf32> to vector<8x128xf32>
    %85 = arith.truncf %83 : vector<8x32xf32> to vector<8x32xbf16>
    %cst_17 = arith.constant dense<0.000000e+00> : vector<8x128xf32>
    %86 = tpu.matmul %85, %1, %cst_17 {dimension_numbers = #tpu.dot_dimension_numbers<[1], [0], [0], [1], [0, 0, 1, 1], [], []>} : vector<8x32xbf16>, vector<32x128xbf16>, vector<8x128xf32> -> vector<8x128xf32>
    %87 = vector.broadcast %3 : vector<1x128xf32> to vector<8x128xf32>
    %88 = arith.addf %86, %87 : vector<8x128xf32>
    %89 = vector.extract_strided_slice %84 {offsets = [0, 0], sizes = [8, 64], strides = [1, 1]} : vector<8x128xf32> to vector<8x64xf32>
    %90 = vector.extract_strided_slice %88 {offsets = [0, 0], sizes = [8, 64], strides = [1, 1]} : vector<8x128xf32> to vector<8x64xf32>
    %91 = arith.addf %89, %90 : vector<8x64xf32>
    %92 = arith.negf %91 : vector<8x64xf32>
    %93 = math.exp %92 : vector<8x64xf32>
    %cst_18 = arith.constant 1.000000e+00 : f32
    %94 = vector.broadcast %cst_18 : f32 to vector<8x64xf32>
    %95 = arith.addf %94, %93 : vector<8x64xf32>
    %96 = arith.divf %94, %95 : vector<8x64xf32>
    %97 = vector.extract_strided_slice %96 {offsets = [0, 0], sizes = [8, 32], strides = [1, 1]} : vector<8x64xf32> to vector<8x32xf32>
    %98 = vector.extract_strided_slice %96 {offsets = [0, 32], sizes = [8, 32], strides = [1, 1]} : vector<8x64xf32> to vector<8x32xf32>
    %99 = vector.extract_strided_slice %84 {offsets = [0, 64], sizes = [8, 32], strides = [1, 1]} : vector<8x128xf32> to vector<8x32xf32>
    %100 = vector.extract_strided_slice %88 {offsets = [0, 64], sizes = [8, 32], strides = [1, 1]} : vector<8x128xf32> to vector<8x32xf32>
    %101 = arith.mulf %97, %100 : vector<8x32xf32>
    %102 = arith.addf %99, %101 : vector<8x32xf32>
    %103 = math.tanh %102 : vector<8x32xf32>
    %cst_19 = arith.constant 1.000000e+00 : f32
    %104 = vector.broadcast %cst_19 : f32 to vector<8x32xf32>
    %105 = arith.subf %104, %98 : vector<8x32xf32>
    %106 = arith.mulf %105, %103 : vector<8x32xf32>
    %107 = arith.mulf %98, %83 : vector<8x32xf32>
    %108 = arith.addf %106, %107 : vector<8x32xf32>
    %109 = vector.extract_strided_slice %7 {offsets = [32, 0], sizes = [8, 128], strides = [1, 1]} : vector<64x128xf32> to vector<8x128xf32>
    %110 = arith.truncf %108 : vector<8x32xf32> to vector<8x32xbf16>
    %cst_20 = arith.constant dense<0.000000e+00> : vector<8x128xf32>
    %111 = tpu.matmul %110, %1, %cst_20 {dimension_numbers = #tpu.dot_dimension_numbers<[1], [0], [0], [1], [0, 0, 1, 1], [], []>} : vector<8x32xbf16>, vector<32x128xbf16>, vector<8x128xf32> -> vector<8x128xf32>
    %112 = vector.broadcast %3 : vector<1x128xf32> to vector<8x128xf32>
    %113 = arith.addf %111, %112 : vector<8x128xf32>
    %114 = vector.extract_strided_slice %109 {offsets = [0, 0], sizes = [8, 64], strides = [1, 1]} : vector<8x128xf32> to vector<8x64xf32>
    %115 = vector.extract_strided_slice %113 {offsets = [0, 0], sizes = [8, 64], strides = [1, 1]} : vector<8x128xf32> to vector<8x64xf32>
    %116 = arith.addf %114, %115 : vector<8x64xf32>
    %117 = arith.negf %116 : vector<8x64xf32>
    %118 = math.exp %117 : vector<8x64xf32>
    %cst_21 = arith.constant 1.000000e+00 : f32
    %119 = vector.broadcast %cst_21 : f32 to vector<8x64xf32>
    %120 = arith.addf %119, %118 : vector<8x64xf32>
    %121 = arith.divf %119, %120 : vector<8x64xf32>
    %122 = vector.extract_strided_slice %121 {offsets = [0, 0], sizes = [8, 32], strides = [1, 1]} : vector<8x64xf32> to vector<8x32xf32>
    %123 = vector.extract_strided_slice %121 {offsets = [0, 32], sizes = [8, 32], strides = [1, 1]} : vector<8x64xf32> to vector<8x32xf32>
    %124 = vector.extract_strided_slice %109 {offsets = [0, 64], sizes = [8, 32], strides = [1, 1]} : vector<8x128xf32> to vector<8x32xf32>
    %125 = vector.extract_strided_slice %113 {offsets = [0, 64], sizes = [8, 32], strides = [1, 1]} : vector<8x128xf32> to vector<8x32xf32>
    %126 = arith.mulf %122, %125 : vector<8x32xf32>
    %127 = arith.addf %124, %126 : vector<8x32xf32>
    %128 = math.tanh %127 : vector<8x32xf32>
    %cst_22 = arith.constant 1.000000e+00 : f32
    %129 = vector.broadcast %cst_22 : f32 to vector<8x32xf32>
    %130 = arith.subf %129, %123 : vector<8x32xf32>
    %131 = arith.mulf %130, %128 : vector<8x32xf32>
    %132 = arith.mulf %123, %108 : vector<8x32xf32>
    %133 = arith.addf %131, %132 : vector<8x32xf32>
    %134 = vector.extract_strided_slice %7 {offsets = [40, 0], sizes = [8, 128], strides = [1, 1]} : vector<64x128xf32> to vector<8x128xf32>
    %135 = arith.truncf %133 : vector<8x32xf32> to vector<8x32xbf16>
    %cst_23 = arith.constant dense<0.000000e+00> : vector<8x128xf32>
    %136 = tpu.matmul %135, %1, %cst_23 {dimension_numbers = #tpu.dot_dimension_numbers<[1], [0], [0], [1], [0, 0, 1, 1], [], []>} : vector<8x32xbf16>, vector<32x128xbf16>, vector<8x128xf32> -> vector<8x128xf32>
    %137 = vector.broadcast %3 : vector<1x128xf32> to vector<8x128xf32>
    %138 = arith.addf %136, %137 : vector<8x128xf32>
    %139 = vector.extract_strided_slice %134 {offsets = [0, 0], sizes = [8, 64], strides = [1, 1]} : vector<8x128xf32> to vector<8x64xf32>
    %140 = vector.extract_strided_slice %138 {offsets = [0, 0], sizes = [8, 64], strides = [1, 1]} : vector<8x128xf32> to vector<8x64xf32>
    %141 = arith.addf %139, %140 : vector<8x64xf32>
    %142 = arith.negf %141 : vector<8x64xf32>
    %143 = math.exp %142 : vector<8x64xf32>
    %cst_24 = arith.constant 1.000000e+00 : f32
    %144 = vector.broadcast %cst_24 : f32 to vector<8x64xf32>
    %145 = arith.addf %144, %143 : vector<8x64xf32>
    %146 = arith.divf %144, %145 : vector<8x64xf32>
    %147 = vector.extract_strided_slice %146 {offsets = [0, 0], sizes = [8, 32], strides = [1, 1]} : vector<8x64xf32> to vector<8x32xf32>
    %148 = vector.extract_strided_slice %146 {offsets = [0, 32], sizes = [8, 32], strides = [1, 1]} : vector<8x64xf32> to vector<8x32xf32>
    %149 = vector.extract_strided_slice %134 {offsets = [0, 64], sizes = [8, 32], strides = [1, 1]} : vector<8x128xf32> to vector<8x32xf32>
    %150 = vector.extract_strided_slice %138 {offsets = [0, 64], sizes = [8, 32], strides = [1, 1]} : vector<8x128xf32> to vector<8x32xf32>
    %151 = arith.mulf %147, %150 : vector<8x32xf32>
    %152 = arith.addf %149, %151 : vector<8x32xf32>
    %153 = math.tanh %152 : vector<8x32xf32>
    %cst_25 = arith.constant 1.000000e+00 : f32
    %154 = vector.broadcast %cst_25 : f32 to vector<8x32xf32>
    %155 = arith.subf %154, %148 : vector<8x32xf32>
    %156 = arith.mulf %155, %153 : vector<8x32xf32>
    %157 = arith.mulf %148, %133 : vector<8x32xf32>
    %158 = arith.addf %156, %157 : vector<8x32xf32>
    %159 = vector.extract_strided_slice %7 {offsets = [48, 0], sizes = [8, 128], strides = [1, 1]} : vector<64x128xf32> to vector<8x128xf32>
    %160 = arith.truncf %158 : vector<8x32xf32> to vector<8x32xbf16>
    %cst_26 = arith.constant dense<0.000000e+00> : vector<8x128xf32>
    %161 = tpu.matmul %160, %1, %cst_26 {dimension_numbers = #tpu.dot_dimension_numbers<[1], [0], [0], [1], [0, 0, 1, 1], [], []>} : vector<8x32xbf16>, vector<32x128xbf16>, vector<8x128xf32> -> vector<8x128xf32>
    %162 = vector.broadcast %3 : vector<1x128xf32> to vector<8x128xf32>
    %163 = arith.addf %161, %162 : vector<8x128xf32>
    %164 = vector.extract_strided_slice %159 {offsets = [0, 0], sizes = [8, 64], strides = [1, 1]} : vector<8x128xf32> to vector<8x64xf32>
    %165 = vector.extract_strided_slice %163 {offsets = [0, 0], sizes = [8, 64], strides = [1, 1]} : vector<8x128xf32> to vector<8x64xf32>
    %166 = arith.addf %164, %165 : vector<8x64xf32>
    %167 = arith.negf %166 : vector<8x64xf32>
    %168 = math.exp %167 : vector<8x64xf32>
    %cst_27 = arith.constant 1.000000e+00 : f32
    %169 = vector.broadcast %cst_27 : f32 to vector<8x64xf32>
    %170 = arith.addf %169, %168 : vector<8x64xf32>
    %171 = arith.divf %169, %170 : vector<8x64xf32>
    %172 = vector.extract_strided_slice %171 {offsets = [0, 0], sizes = [8, 32], strides = [1, 1]} : vector<8x64xf32> to vector<8x32xf32>
    %173 = vector.extract_strided_slice %171 {offsets = [0, 32], sizes = [8, 32], strides = [1, 1]} : vector<8x64xf32> to vector<8x32xf32>
    %174 = vector.extract_strided_slice %159 {offsets = [0, 64], sizes = [8, 32], strides = [1, 1]} : vector<8x128xf32> to vector<8x32xf32>
    %175 = vector.extract_strided_slice %163 {offsets = [0, 64], sizes = [8, 32], strides = [1, 1]} : vector<8x128xf32> to vector<8x32xf32>
    %176 = arith.mulf %172, %175 : vector<8x32xf32>
    %177 = arith.addf %174, %176 : vector<8x32xf32>
    %178 = math.tanh %177 : vector<8x32xf32>
    %cst_28 = arith.constant 1.000000e+00 : f32
    %179 = vector.broadcast %cst_28 : f32 to vector<8x32xf32>
    %180 = arith.subf %179, %173 : vector<8x32xf32>
    %181 = arith.mulf %180, %178 : vector<8x32xf32>
    %182 = arith.mulf %173, %158 : vector<8x32xf32>
    %183 = arith.addf %181, %182 : vector<8x32xf32>
    %184 = vector.extract_strided_slice %7 {offsets = [56, 0], sizes = [8, 128], strides = [1, 1]} : vector<64x128xf32> to vector<8x128xf32>
    %185 = arith.truncf %183 : vector<8x32xf32> to vector<8x32xbf16>
    %cst_29 = arith.constant dense<0.000000e+00> : vector<8x128xf32>
    %186 = tpu.matmul %185, %1, %cst_29 {dimension_numbers = #tpu.dot_dimension_numbers<[1], [0], [0], [1], [0, 0, 1, 1], [], []>} : vector<8x32xbf16>, vector<32x128xbf16>, vector<8x128xf32> -> vector<8x128xf32>
    %187 = vector.broadcast %3 : vector<1x128xf32> to vector<8x128xf32>
    %188 = arith.addf %186, %187 : vector<8x128xf32>
    %189 = vector.extract_strided_slice %184 {offsets = [0, 0], sizes = [8, 64], strides = [1, 1]} : vector<8x128xf32> to vector<8x64xf32>
    %190 = vector.extract_strided_slice %188 {offsets = [0, 0], sizes = [8, 64], strides = [1, 1]} : vector<8x128xf32> to vector<8x64xf32>
    %191 = arith.addf %189, %190 : vector<8x64xf32>
    %192 = arith.negf %191 : vector<8x64xf32>
    %193 = math.exp %192 : vector<8x64xf32>
    %cst_30 = arith.constant 1.000000e+00 : f32
    %194 = vector.broadcast %cst_30 : f32 to vector<8x64xf32>
    %195 = arith.addf %194, %193 : vector<8x64xf32>
    %196 = arith.divf %194, %195 : vector<8x64xf32>
    %197 = vector.extract_strided_slice %196 {offsets = [0, 0], sizes = [8, 32], strides = [1, 1]} : vector<8x64xf32> to vector<8x32xf32>
    %198 = vector.extract_strided_slice %196 {offsets = [0, 32], sizes = [8, 32], strides = [1, 1]} : vector<8x64xf32> to vector<8x32xf32>
    %199 = vector.extract_strided_slice %184 {offsets = [0, 64], sizes = [8, 32], strides = [1, 1]} : vector<8x128xf32> to vector<8x32xf32>
    %200 = vector.extract_strided_slice %188 {offsets = [0, 64], sizes = [8, 32], strides = [1, 1]} : vector<8x128xf32> to vector<8x32xf32>
    %201 = arith.mulf %197, %200 : vector<8x32xf32>
    %202 = arith.addf %199, %201 : vector<8x32xf32>
    %203 = math.tanh %202 : vector<8x32xf32>
    %cst_31 = arith.constant 1.000000e+00 : f32
    %204 = vector.broadcast %cst_31 : f32 to vector<8x32xf32>
    %205 = arith.subf %204, %198 : vector<8x32xf32>
    %206 = arith.mulf %205, %203 : vector<8x32xf32>
    %207 = arith.mulf %198, %183 : vector<8x32xf32>
    %208 = arith.addf %206, %207 : vector<8x32xf32>
    %209 = arith.truncf %208 : vector<8x32xf32> to vector<8x32xbf16>
    %c0_32 = arith.constant 0 : index
    %c0_33 = arith.constant 0 : index
    %210 = vector.load %arg3[%c0_32, %c0_33] : memref<32x4xbf16, #tpu.memory_space<vmem>>, vector<32x4xbf16>
    %cst_34 = arith.constant dense<0.000000e+00> : vector<8x4xf32>
    %211 = tpu.matmul %209, %210, %cst_34 {dimension_numbers = #tpu.dot_dimension_numbers<[1], [0], [0], [1], [0, 0, 1, 1], [], []>} : vector<8x32xbf16>, vector<32x4xbf16>, vector<8x4xf32> -> vector<8x4xf32>
    %c2 = arith.constant 2 : index
    %c0_35 = arith.constant 0 : index
    %212 = vector.load %arg2[%c2, %c0_35] : memref<3x128xf32, #tpu.memory_space<vmem>>, vector<1x4xf32>
    %213 = vector.broadcast %212 : vector<1x4xf32> to vector<8x4xf32>
    %214 = arith.addf %211, %213 : vector<8x4xf32>
    %cst_36 = arith.constant dense<0xFF800000> : vector<8xf32>
    %215 = vector.multi_reduction <maximumf>, %214, %cst_36 [1] : vector<8x4xf32> to vector<8xf32>
    %216 = vector.shape_cast %215 : vector<8xf32> to vector<8x1xf32>
    %217 = vector.broadcast %216 : vector<8x1xf32> to vector<8x4xf32>
    %218 = arith.subf %214, %217 : vector<8x4xf32>
    %219 = math.exp %218 : vector<8x4xf32>
    %cst_37 = arith.constant dense<0.000000e+00> : vector<8xf32>
    %220 = vector.multi_reduction <add>, %219, %cst_37 [1] : vector<8x4xf32> to vector<8xf32>
    %221 = vector.shape_cast %220 : vector<8xf32> to vector<8x1xf32>
    %222 = math.log %221 : vector<8x1xf32>
    %223 = arith.addf %222, %216 : vector<8x1xf32>
    %224 = vector.broadcast %223 : vector<8x1xf32> to vector<8x4xf32>
    %225 = arith.subf %214, %224 : vector<8x4xf32>
    %c0_38 = arith.constant 0 : index
    %c0_39 = arith.constant 0 : index
    %226 = vector.load %arg4[%c0_38, %c0_39] : memref<8x4xf32, #tpu.memory_space<vmem>>, vector<8x4xf32>
    %227 = arith.mulf %226, %225 : vector<8x4xf32>
    %228 = vector.shape_cast %227 : vector<8x4xf32> to vector<1x8x4xf32>
    %cst_40 = arith.constant dense<0.000000e+00> : vector<1xf32>
    %229 = vector.multi_reduction <add>, %228, %cst_40 [1, 2] : vector<1x8x4xf32> to vector<1xf32>
    %230 = vector.shape_cast %229 : vector<1xf32> to vector<1x1x1xf32>
    %231 = vector.extract %230[0, 0, 0] : f32 from vector<1x1x1xf32>
    %cst_41 = arith.constant 0.000000e+00 : f32
    %232 = arith.subf %cst_41, %231 : f32
    %cst_42 = arith.constant 5.000000e-01 : f32
    %233 = arith.mulf %232, %cst_42 : f32
    %c0_43 = arith.constant 0 : index
    %c0_44 = arith.constant 0 : index
    %234 = memref.load %arg5[%c0_43, %c0_44] : memref<1x1xf32, #tpu.memory_space<smem>>
    memref.store %233, %arg5[%c0_43, %c0_44] : memref<1x1xf32, #tpu.memory_space<smem>>
    return
  }
}

</mosaic_0001>

<llo_original>
// kernel: tpu_custom_call.1
$region0: #{tpu_custom_call.1}
  #allocation0 [shape = 'u32[]', space=smem, size = 0x4, offset = 0x4, fixed_abs, tag = 'smem constant byte address 0x4 - core index']
  #allocation1 [shape = 'u32[144,128]{1,0:T(1,128)}', space=vmem, size = 0x12000, scoped, tag = 'internal scratch']
  %s0 = inlined_call_operand.vmem [shape: bf16[64,16], index: 0, kind: input, shape index: {}]
  %s1 = inlined_call_operand.vmem [shape: bf16[48,128], index: 1, kind: input, shape index: {}]
  %s2 = inlined_call_operand.vmem [shape: f32[3,128], index: 2, kind: input, shape index: {}]
  %s3 = inlined_call_operand.vmem [shape: bf16[32,4], index: 3, kind: input, shape index: {}]
  %s4 = inlined_call_operand.vmem [shape: f32[8,4], index: 4, kind: input, shape index: {}]
  %s5 = inlined_call_operand.hbm [shape: f32[1,1], index: 5, kind: output, shape index: {}]
  %s6 = sld [smem:[#allocation0]]
  $region30: #{tpu_custom_call.1} parent=0
    _
  %s8 = ssub.s32 1, %s6
  %s9 = scalar_select 0, %s8, %s6
  $region1: #{tpu_custom_call.1} parent=0
    #allocation2 [shape = 'u8[512]{0}', space=smem, size = 0x200, scoped, tag = 'output window, operand 0, single buffered']
    #allocation3 [shape = 's32[1]{0}', space=sflag, size = 0x4, scoped, tag = 'scoped memory for tpu_custom_call.1']
    %10 = vsyncpa [#allocation3], 0
    // Predicated region
    $region2: #{tpu_custom_call.1} parent=1 // pred_check
      _
    $region3: #{tpu_custom_call.1} parent=1 // pred_check_branch
      %12 = sbr.rel (0) target = $region5
    $region4: #{tpu_custom_call.1} parent=1 // pred_region
      _
    $region5: #{tpu_custom_call.1} parent=1 // pred_fallthru
      _
    // Predicated region
    $region6: #{tpu_custom_call.1} parent=1 // pred_check
      _
    $region7: #{tpu_custom_call.1} parent=1 // pred_check_branch
      %14 = sbr.rel (0) target = $region9
    $region8: #{tpu_custom_call.1} parent=1 // pred_region
      _
    $region9: #{tpu_custom_call.1} parent=1 // pred_fallthru
      _
    // Predicated region
    $region10: #{tpu_custom_call.1} parent=1 // pred_check
      _
    $region11: #{tpu_custom_call.1} parent=1 // pred_check_branch
      %16 = sbr.rel (0) target = $region13
    $region12: #{tpu_custom_call.1} parent=1 // pred_region
      _
    $region13: #{tpu_custom_call.1} parent=1 // pred_fallthru
      _
    // Predicated region
    $region14: #{tpu_custom_call.1} parent=1 // pred_check
      _
    $region15: #{tpu_custom_call.1} parent=1 // pred_check_branch
      %18 = sbr.rel (0) target = $region17
    $region16: #{tpu_custom_call.1} parent=1 // pred_region
      _
    $region17: #{tpu_custom_call.1} parent=1 // pred_fallthru
      _
    // Predicated region
    $region18: #{tpu_custom_call.1} parent=1 // pred_check
      _
    $region19: #{tpu_custom_call.1} parent=1 // pred_check_branch
      %20 = sbr.rel (0) target = $region21
    $region20: #{tpu_custom_call.1} parent=1 // pred_region
      _
    $region21: #{tpu_custom_call.1} parent=1 // pred_fallthru
      _
    %v22 = vld [vmem:[%s1] sm:$0xf]
    %v23 = vld [vmem:[%s1 + $0x4] sm:$0xf]
    %v24 = vld [vmem:[%s1 + $0x8] sm:$0xf]
    %v25 = vld [vmem:[%s1 + $0xc] sm:$0xf]
    %v26 = vld [vmem:[%s1 + $0x10] sm:$0xf]
    %v27 = vld [vmem:[%s1 + $0x14] sm:$0xf]
    %v28 = vld [vmem:[%s2] sm:$0x1]
    %v29 = vld [vmem:[%s2 + $0x1] sm:$0x1]
    %v30 = vld [vmem:[%s0] sm:$0xf]
    %v31 = vld [vmem:[%s0 + $0x4] sm:$0xf]
    %v32 = vld [vmem:[%s0 + $0x8] sm:$0xf]
    %v33 = vld [vmem:[%s0 + $0xc] sm:$0xf]
    %v34 = vld [vmem:[%s0 + $0x10] sm:$0xf]
    %v35 = vld [vmem:[%s0 + $0x14] sm:$0xf]
    %v36 = vld [vmem:[%s0 + $0x18] sm:$0xf]
    %v37 = vld [vmem:[%s0 + $0x1c] sm:$0xf]
    %v38 = vlaneseq
    %v39 = vshrl.u32 %v38, 7
    %v40 = vsub.s32 0, %v39
    %v41 = vrot.slane %v28, %v40
    %v50 = vunpack.c.l.b16 %v30
    %v51 = vunpack.c.l.b16 %v31
    %v52 = vunpack.c.l.b16 %v32
    %v53 = vunpack.c.l.b16 %v33
    %v54 = vunpack.c.l.b16 %v34
    %v55 = vunpack.c.l.b16 %v35
    %v56 = vunpack.c.l.b16 %v36
    %v57 = vunpack.c.l.b16 %v37
    %v58 = vpack.c.b16 %v51, %v50
    %v59 = vpack.c.b16 %v53, %v52
    %v60 = vpack.c.b16 %v55, %v54
    %v61 = vpack.c.b16 %v57, %v56
    %v64 = vunpack.c.l.b16 %v22
    %v65 = vunpack.c.l.b16 %v23
    %v66 = vpack.c.b16 %v65, %v64
    %vm68 = vcmask 130048
    %v70 = vsel %vm68, %v58, 0
    %v73 = vsel %vm68, %v59, 0
    %v76 = vsel %vm68, %v60, 0
    %v79 = vsel %vm68, %v61, 0
    %81 = vmatprep.subr.bf16.mxu0 0
    %82 = vmatpush1.bf16.msra.mxu0 %v66
    %83 = vmatprep.subr.bf16.mxu0 0
    %84 = vmatpush1.bf16.msra.mxu0 0
    %85 = vmatprep.subr.bf16.mxu0 0
    %86 = vmatpush1.bf16.msra.mxu0 0
    %87 = vmatprep.subr.bf16.mxu0 0
    %88 = vmatpush1.bf16.msra.mxu0 0
    %89 = vmatprep.subr.bf16.mxu0 0
    %90 = vmatpush1.bf16.msra.mxu0 0
    %91 = vmatprep.subr.bf16.mxu0 0
    %92 = vmatpush1.bf16.msra.mxu0 0
    %93 = vmatprep.subr.bf16.mxu0 0
    %94 = vmatpush1.bf16.msra.mxu0 0
    %95 = vmatprep.subr.bf16.mxu0 0
    %96 = vmatpush1.bf16.msra.mxu0 0
    %97 = vmatprep.subr.bf16.mxu0 0
    %98 = vmatpush1.bf16.msra.mxu0 0
    %99 = vmatprep.subr.bf16.mxu0 0
    %100 = vmatpush1.bf16.msra.mxu0 0
    %101 = vmatprep.subr.bf16.mxu0 0
    %102 = vmatpush1.bf16.msra.mxu0 0
    %103 = vmatprep.subr.bf16.mxu0 0
    %104 = vmatpush1.bf16.msra.mxu0 0
    %105 = vmatprep.subr.bf16.mxu0 0
    %106 = vmatpush1.bf16.msra.mxu0 0
    %107 = vmatprep.subr.bf16.mxu0 0
    %108 = vmatpush1.bf16.msra.mxu0 0
    %109 = vmatprep.subr.bf16.mxu0 0
    %110 = vmatpush1.bf16.msra.mxu0 0
    %111 = vmatprep.subr.bf16.mxu0 0
    %112 = vmatpush1.bf16.msra.mxu0 0
    %113 = vmatprep.mubr.bf16.mxu0 0
    %114 = vmatmul.mubr.bf16.gmra.mrb[0].mxu0 %v70
    %v115 = vpop.f32.mrb[0].mxu0
    %v116 = vadd.f32 %v41, %v115
    %v117 = vpop.f32.mrb[0].mxu0
    %v118 = vpop.f32.mrb[0].mxu0
    %v119 = vadd.f32 %v41, %v118
    %v120 = vpop.f32.mrb[0].mxu0
    %121 = vmatprep.mubr.bf16.mxu0 0
    %122 = vmatmul.mubr.bf16.gmra.mrb[0].mxu0 %v73
    %v123 = vpop.f32.mrb[0].mxu0
    %v124 = vadd.f32 %v41, %v123
    %v125 = vpop.f32.mrb[0].mxu0
    %v126 = vpop.f32.mrb[0].mxu0
    %v127 = vadd.f32 %v41, %v126
    %v128 = vpop.f32.mrb[0].mxu0
    %129 = vmatprep.mubr.bf16.mxu0 0
    %130 = vmatmul.mubr.bf16.gmra.mrb[0].mxu0 %v76
    %v131 = vpop.f32.mrb[0].mxu0
    %v132 = vadd.f32 %v41, %v131
    %v133 = vpop.f32.mrb[0].mxu0
    %v134 = vpop.f32.mrb[0].mxu0
    %v135 = vadd.f32 %v41, %v134
    %v136 = vpop.f32.mrb[0].mxu0
    %137 = vmatprep.mubr.bf16.mxu0 0
    %138 = vmatmul.mubr.bf16.gmra.mrb[0].mxu0 %v79
    %v139 = vpop.f32.mrb[0].mxu0
    %v140 = vadd.f32 %v41, %v139
    %v141 = vpop.f32.mrb[0].mxu0
    %v142 = vpop.f32.mrb[0].mxu0
    %v143 = vadd.f32 %v41, %v142
    %v144 = vpop.f32.mrb[0].mxu0
    %145 = vdwg.mxu0
    %v146 = vlaneseq
    %v147 = vshrl.u32 %v146, 7
    %v148 = vsub.s32 0, %v147
    %v149 = vrot.slane %v29, %v148
    %v154 = vunpack.c.l.b16 %v24
    %v155 = vunpack.c.l.b16 %v25
    %v156 = vunpack.c.l.b16 %v26
    %v157 = vunpack.c.l.b16 %v27
    %v158 = vpack.c.b16 %v155, %v154
    %v159 = vpack.c.b16 %v157, %v156
    %vm162 = vcmask 261120
    %v164 = vsel %vm162, 0, 0
    %166 = vmatprep.subr.bf16.mxu0 0
    %167 = vmatpush1.bf16.msra.mxu0 %v158
    %168 = vmatprep.subr.bf16.mxu0 0
    %169 = vmatpush1.bf16.msra.mxu0 %v159
    %170 = vmatprep.subr.bf16.mxu0 0
    %171 = vmatpush1.bf16.msra.mxu0 0
    %172 = vmatprep.subr.bf16.mxu0 0
    %173 = vmatpush1.bf16.msra.mxu0 0
    %174 = vmatprep.subr.bf16.mxu0 0
    %175 = vmatpush1.bf16.msra.mxu0 0
    %176 = vmatprep.subr.bf16.mxu0 0
    %177 = vmatpush1.bf16.msra.mxu0 0
    %178 = vmatprep.subr.bf16.mxu0 0
    %179 = vmatpush1.bf16.msra.mxu0 0
    %180 = vmatprep.subr.bf16.mxu0 0
    %181 = vmatpush1.bf16.msra.mxu0 0
    %182 = vmatprep.subr.bf16.mxu0 0
    %183 = vmatpush1.bf16.msra.mxu0 0
    %184 = vmatprep.subr.bf16.mxu0 0
    %185 = vmatpush1.bf16.msra.mxu0 0
    %186 = vmatprep.subr.bf16.mxu0 0
    %187 = vmatpush1.bf16.msra.mxu0 0
    %188 = vmatprep.subr.bf16.mxu0 0
    %189 = vmatpush1.bf16.msra.mxu0 0
    %190 = vmatprep.subr.bf16.mxu0 0
    %191 = vmatpush1.bf16.msra.mxu0 0
    %192 = vmatprep.subr.bf16.mxu0 0
    %193 = vmatpush1.bf16.msra.mxu0 0
    %194 = vmatprep.subr.bf16.mxu0 0
    %195 = vmatpush1.bf16.msra.mxu0 0
    %196 = vmatprep.subr.bf16.mxu0 0
    %197 = vmatpush1.bf16.msra.mxu0 0
    %198 = vmatprep.mubr.bf16.mxu0 0
    %199 = vmatmul.mubr.bf16.gmra.mrb[0].mxu0 %v164
    %v200 = vpop.f32.mrb[0].mxu0
    %v201 = vadd.f32 %v149, %v200
    %v202 = vpop.f32.mrb[0].mxu0
    %v203 = vpop.f32.mrb[0].mxu0
    %v204 = vpop.f32.mrb[0].mxu0
    %205 = vdwg.mxu0
    %v206 = vadd.f32 %v116, %v201
    %v207 = vxor.u32 %v206, 2147483648
    %v208 = vmul.f32 %v207, 1.442695
    %v209 = vpow.pop %v208
    %v210 = vadd.f32 %v209, 1.0
    %v211 = vrcp.pop %v210
    %v212 = vmul.f32 1.0, %v211
    %214 = vrot.lane.b32.xlu0 %v201, 64
    %v215 = vpop.permute.xlu0 %214
    %v217 = vmul.f32 %v212, %v215
    %219 = vrot.lane.b32.xlu0 %v217, 64
    %v220 = vpop.permute.xlu0 %219
    %v222 = vadd.f32 %v116, %v220
    %v223 = vtanh.pop %v222
    %v224 = vsub.f32 1.0, %v212
    %226 = vrot.lane.b32.xlu0 %v223, 96
    %v227 = vpop.permute.xlu0 %226
    %v229 = vmul.f32 %v224, %v227
    %v230 = vmul.f32 %v212, 0.0
    %v231 = vadd.f32 %v229, %v230
    %v232 = vpack.c.bf16 %v231, %v231
    %234 = vrot.lane.b32.xlu0 %v232, 96
    %v235 = vpop.permute.xlu0 %234
    %v237 = vsel %vm162, %v235, 0
    %239 = vmatprep.subr.bf16.mxu0 0
    %240 = vmatpush1.bf16.msra.mxu0 %v158
    %241 = vmatprep.subr.bf16.mxu0 0
    %242 = vmatpush1.bf16.msra.mxu0 %v159
    %243 = vmatprep.subr.bf16.mxu0 0
    %244 = vmatpush1.bf16.msra.mxu0 0
    %245 = vmatprep.subr.bf16.mxu0 0
    %246 = vmatpush1.bf16.msra.mxu0 0
    %247 = vmatprep.subr.bf16.mxu0 0
    %248 = vmatpush1.bf16.msra.mxu0 0
    %249 = vmatprep.subr.bf16.mxu0 0
    %250 = vmatpush1.bf16.msra.mxu0 0
    %251 = vmatprep.subr.bf16.mxu0 0
    %252 = vmatpush1.bf16.msra.mxu0 0
    %253 = vmatprep.subr.bf16.mxu0 0
    %254 = vmatpush1.bf16.msra.mxu0 0
    %255 = vmatprep.subr.bf16.mxu0 0
    %256 = vmatpush1.bf16.msra.mxu0 0
    %257 = vmatprep.subr.bf16.mxu0 0
    %258 = vmatpush1.bf16.msra.mxu0 0
    %259 = vmatprep.subr.bf16.mxu0 0
    %260 = vmatpush1.bf16.msra.mxu0 0
    %261 = vmatprep.subr.bf16.mxu0 0
    %262 = vmatpush1.bf16.msra.mxu0 0
    %263 = vmatprep.subr.bf16.mxu0 0
    %264 = vmatpush1.bf16.msra.mxu0 0
    %265 = vmatprep.subr.bf16.mxu0 0
    %266 = vmatpush1.bf16.msra.mxu0 0
    %267 = vmatprep.subr.bf16.mxu0 0
    %268 = vmatpush1.bf16.msra.mxu0 0
    %269 = vmatprep.subr.bf16.mxu0 0
    %270 = vmatpush1.bf16.msra.mxu0 0
    %271 = vmatprep.mubr.bf16.mxu0 0
    %272 = vmatmul.mubr.bf16.gmra.mrb[0].mxu0 %v237
    %v273 = vpop.f32.mrb[0].mxu0
    %v274 = vadd.f32 %v149, %v273
    %v275 = vpop.f32.mrb[0].mxu0
    %v276 = vpop.f32.mrb[0].mxu0
    %v277 = vpop.f32.mrb[0].mxu0
    %278 = vdwg.mxu0
    %v279 = vadd.f32 %v119, %v274
    %v280 = vxor.u32 %v279, 2147483648
    %v281 = vmul.f32 %v280, 1.442695
    %v282 = vpow.pop %v281
    %v283 = vadd.f32 %v282, 1.0
    %v284 = vrcp.pop %v283
    %v285 = vmul.f32 1.0, %v284
    %287 = vrot.lane.b32.xlu0 %v274, 64
    %v288 = vpop.permute.xlu0 %287
    %v290 = vmul.f32 %v285, %v288
    %292 = vrot.lane.b32.xlu0 %v290, 64
    %v293 = vpop.permute.xlu0 %292
    %v295 = vadd.f32 %v119, %v293
    %v296 = vtanh.pop %v295
    %v297 = vsub.f32 1.0, %v285
    %299 = vrot.lane.b32.xlu0 %v296, 96
    %v300 = vpop.permute.xlu0 %299
    %v302 = vmul.f32 %v297, %v300
    %v303 = vmul.f32 %v285, %v231
    %v304 = vadd.f32 %v302, %v303
    %v305 = vpack.c.bf16 %v304, %v304
    %307 = vrot.lane.b32.xlu0 %v305, 96
    %v308 = vpop.permute.xlu0 %307
    %v310 = vsel %vm162, %v308, 0
    %312 = vmatprep.subr.bf16.mxu0 0
    %313 = vmatpush1.bf16.msra.mxu0 %v158
    %314 = vmatprep.subr.bf16.mxu0 0
    %315 = vmatpush1.bf16.msra.mxu0 %v159
    %316 = vmatprep.subr.bf16.mxu0 0
    %317 = vmatpush1.bf16.msra.mxu0 0
    %318 = vmatprep.subr.bf16.mxu0 0
    %319 = vmatpush1.bf16.msra.mxu0 0
    %320 = vmatprep.subr.bf16.mxu0 0
    %321 = vmatpush1.bf16.msra.mxu0 0
    %322 = vmatprep.subr.bf16.mxu0 0
    %323 = vmatpush1.bf16.msra.mxu0 0
    %324 = vmatprep.subr.bf16.mxu0 0
    %325 = vmatpush1.bf16.msra.mxu0 0
    %326 = vmatprep.subr.bf16.mxu0 0
    %327 = vmatpush1.bf16.msra.mxu0 0
    %328 = vmatprep.subr.bf16.mxu0 0
    %329 = vmatpush1.bf16.msra.mxu0 0
    %330 = vmatprep.subr.bf16.mxu0 0
    %331 = vmatpush1.bf16.msra.mxu0 0
    %332 = vmatprep.subr.bf16.mxu0 0
    %333 = vmatpush1.bf16.msra.mxu0 0
    %334 = vmatprep.subr.bf16.mxu0 0
    %335 = vmatpush1.bf16.msra.mxu0 0
    %336 = vmatprep.subr.bf16.mxu0 0
    %337 = vmatpush1.bf16.msra.mxu0 0
    %338 = vmatprep.subr.bf16.mxu0 0
    %339 = vmatpush1.bf16.msra.mxu0 0
    %340 = vmatprep.subr.bf16.mxu0 0
    %341 = vmatpush1.bf16.msra.mxu0 0
    %342 = vmatprep.subr.bf16.mxu0 0
    %343 = vmatpush1.bf16.msra.mxu0 0
    %344 = vmatprep.mubr.bf16.mxu0 0
    %345 = vmatmul.mubr.bf16.gmra.mrb[0].mxu0 %v310
    %v346 = vpop.f32.mrb[0].mxu0
    %v347 = vadd.f32 %v149, %v346
    %v348 = vpop.f32.mrb[0].mxu0
    %v349 = vpop.f32.mrb[0].mxu0
    %v350 = vpop.f32.mrb[0].mxu0
    %351 = vdwg.mxu0
    %v352 = vadd.f32 %v124, %v347
    %v353 = vxor.u32 %v352, 2147483648
    %v354 = vmul.f32 %v353, 1.442695
    %v355 = vpow.pop %v354
    %v356 = vadd.f32 %v355, 1.0
    %v357 = vrcp.pop %v356
    %v358 = vmul.f32 1.0, %v357
    %360 = vrot.lane.b32.xlu0 %v347, 64
    %v361 = vpop.permute.xlu0 %360
    %v363 = vmul.f32 %v358, %v361
    %365 = vrot.lane.b32.xlu0 %v363, 64
    %v366 = vpop.permute.xlu0 %365
    %v368 = vadd.f32 %v124, %v366
    %v369 = vtanh.pop %v368
    %v370 = vsub.f32 1.0, %v358
    %372 = vrot.lane.b32.xlu0 %v369, 96
    %v373 = vpop.permute.xlu0 %372
    %v375 = vmul.f32 %v370, %v373
    %v376 = vmul.f32 %v358, %v304
    %v377 = vadd.f32 %v375, %v376
    %v378 = vpack.c.bf16 %v377, %v377
    %380 = vrot.lane.b32.xlu0 %v378, 96
    %v381 = vpop.permute.xlu0 %380
    %v383 = vsel %vm162, %v381, 0
    %385 = vmatprep.subr.bf16.mxu0 0
    %386 = vmatpush1.bf16.msra.mxu0 %v158
    %387 = vmatprep.subr.bf16.mxu0 0
    %388 = vmatpush1.bf16.msra.mxu0 %v159
    %389 = vmatprep.subr.bf16.mxu0 0
    %390 = vmatpush1.bf16.msra.mxu0 0
    %391 = vmatprep.subr.bf16.mxu0 0
    %392 = vmatpush1.bf16.msra.mxu0 0
    %393 = vmatprep.subr.bf16.mxu0 0
    %394 = vmatpush1.bf16.msra.mxu0 0
    %395 = vmatprep.subr.bf16.mxu0 0
    %396 = vmatpush1.bf16.msra.mxu0 0
    %397 = vmatprep.subr.bf16.mxu0 0
    %398 = vmatpush1.bf16.msra.mxu0 0
    %399 = vmatprep.subr.bf16.mxu0 0
    %400 = vmatpush1.bf16.msra.mxu0 0
    %401 = vmatprep.subr.bf16.mxu0 0
    %402 = vmatpush1.bf16.msra.mxu0 0
    %403 = vmatprep.subr.bf16.mxu0 0
    %404 = vmatpush1.bf16.msra.mxu0 0
    %405 = vmatprep.subr.bf16.mxu0 0
    %406 = vmatpush1.bf16.msra.mxu0 0
    %407 = vmatprep.subr.bf16.mxu0 0
    %408 = vmatpush1.bf16.msra.mxu0 0
    %409 = vmatprep.subr.bf16.mxu0 0
    %410 = vmatpush1.bf16.msra.mxu0 0
    %411 = vmatprep.subr.bf16.mxu0 0
    %412 = vmatpush1.bf16.msra.mxu0 0
    %413 = vmatprep.subr.bf16.mxu0 0
    %414 = vmatpush1.bf16.msra.mxu0 0
    %415 = vmatprep.subr.bf16.mxu0 0
    %416 = vmatpush1.bf16.msra.mxu0 0
    %417 = vmatprep.mubr.bf16.mxu0 0
    %418 = vmatmul.mubr.bf16.gmra.mrb[0].mxu0 %v383
    %v419 = vpop.f32.mrb[0].mxu0
    %v420 = vadd.f32 %v149, %v419
    %v421 = vpop.f32.mrb[0].mxu0
    %v422 = vpop.f32.mrb[0].mxu0
    %v423 = vpop.f32.mrb[0].mxu0
    %424 = vdwg.mxu0
    %v425 = vadd.f32 %v127, %v420
    %v426 = vxor.u32 %v425, 2147483648
    %v427 = vmul.f32 %v426, 1.442695
    %v428 = vpow.pop %v427
    %v429 = vadd.f32 %v428, 1.0
    %v430 = vrcp.pop %v429
    %v431 = vmul.f32 1.0, %v430
    %433 = vrot.lane.b32.xlu0 %v420, 64
    %v434 = vpop.permute.xlu0 %433
    %v436 = vmul.f32 %v431, %v434
    %438 = vrot.lane.b32.xlu0 %v436, 64
    %v439 = vpop.permute.xlu0 %438
    %v441 = vadd.f32 %v127, %v439
    %v442 = vtanh.pop %v441
    %v443 = vsub.f32 1.0, %v431
    %445 = vrot.lane.b32.xlu0 %v442, 96
    %v446 = vpop.permute.xlu0 %445
    %v448 = vmul.f32 %v443, %v446
    %v449 = vmul.f32 %v431, %v377
    %v450 = vadd.f32 %v448, %v449
    %v451 = vpack.c.bf16 %v450, %v450
    %453 = vrot.lane.b32.xlu0 %v451, 96
    %v454 = vpop.permute.xlu0 %453
    %v456 = vsel %vm162, %v454, 0
    %458 = vmatprep.subr.bf16.mxu0 0
    %459 = vmatpush1.bf16.msra.mxu0 %v158
    %460 = vmatprep.subr.bf16.mxu0 0
    %461 = vmatpush1.bf16.msra.mxu0 %v159
    %462 = vmatprep.subr.bf16.mxu0 0
    %463 = vmatpush1.bf16.msra.mxu0 0
    %464 = vmatprep.subr.bf16.mxu0 0
    %465 = vmatpush1.bf16.msra.mxu0 0
    %466 = vmatprep.subr.bf16.mxu0 0
    %467 = vmatpush1.bf16.msra.mxu0 0
    %468 = vmatprep.subr.bf16.mxu0 0
    %469 = vmatpush1.bf16.msra.mxu0 0
    %470 = vmatprep.subr.bf16.mxu0 0
    %471 = vmatpush1.bf16.msra.mxu0 0
    %472 = vmatprep.subr.bf16.mxu0 0
    %473 = vmatpush1.bf16.msra.mxu0 0
    %474 = vmatprep.subr.bf16.mxu0 0
    %475 = vmatpush1.bf16.msra.mxu0 0
    %476 = vmatprep.subr.bf16.mxu0 0
    %477 = vmatpush1.bf16.msra.mxu0 0
    %478 = vmatprep.subr.bf16.mxu0 0
    %479 = vmatpush1.bf16.msra.mxu0 0
    %480 = vmatprep.subr.bf16.mxu0 0
    %481 = vmatpush1.bf16.msra.mxu0 0
    %482 = vmatprep.subr.bf16.mxu0 0
    %483 = vmatpush1.bf16.msra.mxu0 0
    %484 = vmatprep.subr.bf16.mxu0 0
    %485 = vmatpush1.bf16.msra.mxu0 0
    %486 = vmatprep.subr.bf16.mxu0 0
    %487 = vmatpush1.bf16.msra.mxu0 0
    %488 = vmatprep.subr.bf16.mxu0 0
    %489 = vmatpush1.bf16.msra.mxu0 0
    %490 = vmatprep.mubr.bf16.mxu0 0
    %491 = vmatmul.mubr.bf16.gmra.mrb[0].mxu0 %v456
    %v492 = vpop.f32.mrb[0].mxu0
    %v493 = vadd.f32 %v149, %v492
    %v494 = vpop.f32.mrb[0].mxu0
    %v495 = vpop.f32.mrb[0].mxu0
    %v496 = vpop.f32.mrb[0].mxu0
    %497 = vdwg.mxu0
    %v498 = vadd.f32 %v132, %v493
    %v499 = vxor.u32 %v498, 2147483648
    %v500 = vmul.f32 %v499, 1.442695
    %v501 = vpow.pop %v500
    %v502 = vadd.f32 %v501, 1.0
    %v503 = vrcp.pop %v502
    %v504 = vmul.f32 1.0, %v503
    %506 = vrot.lane.b32.xlu0 %v493, 64
    %v507 = vpop.permute.xlu0 %506
    %v509 = vmul.f32 %v504, %v507
    %511 = vrot.lane.b32.xlu0 %v509, 64
    %v512 = vpop.permute.xlu0 %511
    %v514 = vadd.f32 %v132, %v512
    %v515 = vtanh.pop %v514
    %v516 = vsub.f32 1.0, %v504
    %518 = vrot.lane.b32.xlu0 %v515, 96
    %v519 = vpop.permute.xlu0 %518
    %v521 = vmul.f32 %v516, %v519
    %v522 = vmul.f32 %v504, %v450
    %v523 = vadd.f32 %v521, %v522
    %v524 = vpack.c.bf16 %v523, %v523
    %526 = vrot.lane.b32.xlu0 %v524, 96
    %v527 = vpop.permute.xlu0 %526
    %v529 = vsel %vm162, %v527, 0
    %531 = vmatprep.subr.bf16.mxu0 0
    %532 = vmatpush1.bf16.msra.mxu0 %v158
    %533 = vmatprep.subr.bf16.mxu0 0
    %534 = vmatpush1.bf16.msra.mxu0 %v159
    %535 = vmatprep.subr.bf16.mxu0 0
    %536 = vmatpush1.bf16.msra.mxu0 0
    %537 = vmatprep.subr.bf16.mxu0 0
    %538 = vmatpush1.bf16.msra.mxu0 0
    %539 = vmatprep.subr.bf16.mxu0 0
    %540 = vmatpush1.bf16.msra.mxu0 0
    %541 = vmatprep.subr.bf16.mxu0 0
    %542 = vmatpush1.bf16.msra.mxu0 0
    %543 = vmatprep.subr.bf16.mxu0 0
    %544 = vmatpush1.bf16.msra.mxu0 0
    %545 = vmatprep.subr.bf16.mxu0 0
    %546 = vmatpush1.bf16.msra.mxu0 0
    %547 = vmatprep.subr.bf16.mxu0 0
    %548 = vmatpush1.bf16.msra.mxu0 0
    %549 = vmatprep.subr.bf16.mxu0 0
    %550 = vmatpush1.bf16.msra.mxu0 0
    %551 = vmatprep.subr.bf16.mxu0 0
    %552 = vmatpush1.bf16.msra.mxu0 0
    %553 = vmatprep.subr.bf16.mxu0 0
    %554 = vmatpush1.bf16.msra.mxu0 0
    %555 = vmatprep.subr.bf16.mxu0 0
    %556 = vmatpush1.bf16.msra.mxu0 0
    %557 = vmatprep.subr.bf16.mxu0 0
    %558 = vmatpush1.bf16.msra.mxu0 0
    %559 = vmatprep.subr.bf16.mxu0 0
    %560 = vmatpush1.bf16.msra.mxu0 0
    %561 = vmatprep.subr.bf16.mxu0 0
    %562 = vmatpush1.bf16.msra.mxu0 0
    %563 = vmatprep.mubr.bf16.mxu0 0
    %564 = vmatmul.mubr.bf16.gmra.mrb[0].mxu0 %v529
    %v565 = vpop.f32.mrb[0].mxu0
    %v566 = vadd.f32 %v149, %v565
    %v567 = vpop.f32.mrb[0].mxu0
    %v568 = vpop.f32.mrb[0].mxu0
    %v569 = vpop.f32.mrb[0].mxu0
    %570 = vdwg.mxu0
    %v571 = vadd.f32 %v135, %v566
    %v572 = vxor.u32 %v571, 2147483648
    %v573 = vmul.f32 %v572, 1.442695
    %v574 = vpow.pop %v573
    %v575 = vadd.f32 %v574, 1.0
    %v576 = vrcp.pop %v575
    %v577 = vmul.f32 1.0, %v576
    %579 = vrot.lane.b32.xlu0 %v566, 64
    %v580 = vpop.permute.xlu0 %579
    %v582 = vmul.f32 %v577, %v580
    %584 = vrot.lane.b32.xlu0 %v582, 64
    %v585 = vpop.permute.xlu0 %584
    %v587 = vadd.f32 %v135, %v585
    %v588 = vtanh.pop %v587
    %v589 = vsub.f32 1.0, %v577
    %591 = vrot.lane.b32.xlu0 %v588, 96
    %v592 = vpop.permute.xlu0 %591
    %v594 = vmul.f32 %v589, %v592
    %v595 = vmul.f32 %v577, %v523
    %v596 = vadd.f32 %v594, %v595
    %v597 = vpack.c.bf16 %v596, %v596
    %599 = vrot.lane.b32.xlu0 %v597, 96
    %v600 = vpop.permute.xlu0 %599
    %v602 = vsel %vm162, %v600, 0
    %604 = vmatprep.subr.bf16.mxu0 0
    %605 = vmatpush1.bf16.msra.mxu0 %v158
    %606 = vmatprep.subr.bf16.mxu0 0
    %607 = vmatpush1.bf16.msra.mxu0 %v159
    %608 = vmatprep.subr.bf16.mxu0 0
    %609 = vmatpush1.bf16.msra.mxu0 0
    %610 = vmatprep.subr.bf16.mxu0 0
    %611 = vmatpush1.bf16.msra.mxu0 0
    %612 = vmatprep.subr.bf16.mxu0 0
    %613 = vmatpush1.bf16.msra.mxu0 0
    %614 = vmatprep.subr.bf16.mxu0 0
    %615 = vmatpush1.bf16.msra.mxu0 0
    %616 = vmatprep.subr.bf16.mxu0 0
    %617 = vmatpush1.bf16.msra.mxu0 0
    %618 = vmatprep.subr.bf16.mxu0 0
    %619 = vmatpush1.bf16.msra.mxu0 0
    %620 = vmatprep.subr.bf16.mxu0 0
    %621 = vmatpush1.bf16.msra.mxu0 0
    %622 = vmatprep.subr.bf16.mxu0 0
    %623 = vmatpush1.bf16.msra.mxu0 0
    %624 = vmatprep.subr.bf16.mxu0 0
    %625 = vmatpush1.bf16.msra.mxu0 0
    %626 = vmatprep.subr.bf16.mxu0 0
    %627 = vmatpush1.bf16.msra.mxu0 0
    %628 = vmatprep.subr.bf16.mxu0 0
    %629 = vmatpush1.bf16.msra.mxu0 0
    %630 = vmatprep.subr.bf16.mxu0 0
    %631 = vmatpush1.bf16.msra.mxu0 0
    %632 = vmatprep.subr.bf16.mxu0 0
    %633 = vmatpush1.bf16.msra.mxu0 0
    %634 = vmatprep.subr.bf16.mxu0 0
    %635 = vmatpush1.bf16.msra.mxu0 0
    %636 = vmatprep.mubr.bf16.mxu0 0
    %637 = vmatmul.mubr.bf16.gmra.mrb[0].mxu0 %v602
    %v638 = vpop.f32.mrb[0].mxu0
    %v639 = vadd.f32 %v149, %v638
    %v640 = vpop.f32.mrb[0].mxu0
    %v641 = vpop.f32.mrb[0].mxu0
    %v642 = vpop.f32.mrb[0].mxu0
    %643 = vdwg.mxu0
    %v644 = vadd.f32 %v140, %v639
    %v645 = vxor.u32 %v644, 2147483648
    %v646 = vmul.f32 %v645, 1.442695
    %v647 = vpow.pop %v646
    %v648 = vadd.f32 %v647, 1.0
    %v649 = vrcp.pop %v648
    %v650 = vmul.f32 1.0, %v649
    %652 = vrot.lane.b32.xlu0 %v639, 64
    %v653 = vpop.permute.xlu0 %652
    %v655 = vmul.f32 %v650, %v653
    %657 = vrot.lane.b32.xlu0 %v655, 64
    %v658 = vpop.permute.xlu0 %657
    %v660 = vadd.f32 %v140, %v658
    %v661 = vtanh.pop %v660
    %v662 = vsub.f32 1.0, %v650
    %664 = vrot.lane.b32.xlu0 %v661, 96
    %v665 = vpop.permute.xlu0 %664
    %v667 = vmul.f32 %v662, %v665
    %v668 = vmul.f32 %v650, %v596
    %v669 = vadd.f32 %v667, %v668
    %v670 = vpack.c.bf16 %v669, %v669
    %672 = vrot.lane.b32.xlu0 %v670, 96
    %v673 = vpop.permute.xlu0 %672
    %v675 = vsel %vm162, %v673, 0
    %677 = vmatprep.subr.bf16.mxu0 0
    %678 = vmatpush1.bf16.msra.mxu0 %v158
    %679 = vmatprep.subr.bf16.mxu0 0
    %680 = vmatpush1.bf16.msra.mxu0 %v159
    %681 = vmatprep.subr.bf16.mxu0 0
    %682 = vmatpush1.bf16.msra.mxu0 0
    %683 = vmatprep.subr.bf16.mxu0 0
    %684 = vmatpush1.bf16.msra.mxu0 0
    %685 = vmatprep.subr.bf16.mxu0 0
    %686 = vmatpush1.bf16.msra.mxu0 0
    %687 = vmatprep.subr.bf16.mxu0 0
    %688 = vmatpush1.bf16.msra.mxu0 0
    %689 = vmatprep.subr.bf16.mxu0 0
    %690 = vmatpush1.bf16.msra.mxu0 0
    %691 = vmatprep.subr.bf16.mxu0 0
    %692 = vmatpush1.bf16.msra.mxu0 0
    %693 = vmatprep.subr.bf16.mxu0 0
    %694 = vmatpush1.bf16.msra.mxu0 0
    %695 = vmatprep.subr.bf16.mxu0 0
    %696 = vmatpush1.bf16.msra.mxu0 0
    %697 = vmatprep.subr.bf16.mxu0 0
    %698 = vmatpush1.bf16.msra.mxu0 0
    %699 = vmatprep.subr.bf16.mxu0 0
    %700 = vmatpush1.bf16.msra.mxu0 0
    %701 = vmatprep.subr.bf16.mxu0 0
    %702 = vmatpush1.bf16.msra.mxu0 0
    %703 = vmatprep.subr.bf16.mxu0 0
    %704 = vmatpush1.bf16.msra.mxu0 0
    %705 = vmatprep.subr.bf16.mxu0 0
    %706 = vmatpush1.bf16.msra.mxu0 0
    %707 = vmatprep.subr.bf16.mxu0 0
    %708 = vmatpush1.bf16.msra.mxu0 0
    %709 = vmatprep.mubr.bf16.mxu0 0
    %710 = vmatmul.mubr.bf16.gmra.mrb[0].mxu0 %v675
    %v711 = vpop.f32.mrb[0].mxu0
    %v712 = vadd.f32 %v149, %v711
    %v713 = vpop.f32.mrb[0].mxu0
    %v714 = vpop.f32.mrb[0].mxu0
    %v715 = vpop.f32.mrb[0].mxu0
    %716 = vdwg.mxu0
    %v717 = vadd.f32 %v143, %v712
    %v718 = vxor.u32 %v717, 2147483648
    %v719 = vmul.f32 %v718, 1.442695
    %v720 = vpow.pop %v719
    %v721 = vadd.f32 %v720, 1.0
    %v722 = vrcp.pop %v721
    %v723 = vmul.f32 1.0, %v722
    %725 = vrot.lane.b32.xlu0 %v712, 64
    %v726 = vpop.permute.xlu0 %725
    %v728 = vmul.f32 %v723, %v726
    %730 = vrot.lane.b32.xlu0 %v728, 64
    %v731 = vpop.permute.xlu0 %730
    %v733 = vadd.f32 %v143, %v731
    %v734 = vtanh.pop %v733
    %v735 = vsub.f32 1.0, %v723
    %737 = vrot.lane.b32.xlu0 %v734, 96
    %v738 = vpop.permute.xlu0 %737
    %v740 = vmul.f32 %v735, %v738
    %v741 = vmul.f32 %v723, %v669
    %v742 = vadd.f32 %v740, %v741
    %v743 = vpack.c.bf16 %v742, %v742
    %v744 = vld [vmem:[%s3] sm:$0xf]
    %v745 = vld [vmem:[%s3 + $0x4] sm:$0xf]
    %v746 = vld [vmem:[%s3 + $0x8] sm:$0xf]
    %v747 = vld [vmem:[%s3 + $0xc] sm:$0xf]
    %v748 = vld [vmem:[%s2 + $0x2] sm:$0x1]
    %v749 = vlaneseq
    %v750 = vshrl.u32 %v749, 7
    %v751 = vsub.s32 0, %v750
    %v752 = vrot.slane %v748, %v751
    %754 = vrot.lane.b32.xlu0 %v743, 96
    %v755 = vpop.permute.xlu0 %754
    %v760 = vunpack.c.l.b16 %v744
    %v761 = vunpack.c.l.b16 %v745
    %v762 = vunpack.c.l.b16 %v746
    %v763 = vunpack.c.l.b16 %v747
    %v764 = vpack.c.b16 %v761, %v760
    %v765 = vpack.c.b16 %v763, %v762
    %v769 = vsel %vm162, %v755, 0
    %771 = vmatprep.subr.bf16.mxu0 0
    %772 = vmatpush1.bf16.msra.mxu0 %v764
    %773 = vmatprep.subr.bf16.mxu0 0
    %774 = vmatpush1.bf16.msra.mxu0 %v765
    %775 = vmatprep.subr.bf16.mxu0 0
    %776 = vmatpush1.bf16.msra.mxu0 0
    %777 = vmatprep.subr.bf16.mxu0 0
    %778 = vmatpush1.bf16.msra.mxu0 0
    %779 = vmatprep.subr.bf16.mxu0 0
    %780 = vmatpush1.bf16.msra.mxu0 0
    %781 = vmatprep.subr.bf16.mxu0 0
    %782 = vmatpush1.bf16.msra.mxu0 0
    %783 = vmatprep.subr.bf16.mxu0 0
    %784 = vmatpush1.bf16.msra.mxu0 0
    %785 = vmatprep.subr.bf16.mxu0 0
    %786 = vmatpush1.bf16.msra.mxu0 0
    %787 = vmatprep.subr.bf16.mxu0 0
    %788 = vmatpush1.bf16.msra.mxu0 0
    %789 = vmatprep.subr.bf16.mxu0 0
    %790 = vmatpush1.bf16.msra.mxu0 0
    %791 = vmatprep.subr.bf16.mxu0 0
    %792 = vmatpush1.bf16.msra.mxu0 0
    %793 = vmatprep.subr.bf16.mxu0 0
    %794 = vmatpush1.bf16.msra.mxu0 0
    %795 = vmatprep.subr.bf16.mxu0 0
    %796 = vmatpush1.bf16.msra.mxu0 0
    %797 = vmatprep.subr.bf16.mxu0 0
    %798 = vmatpush1.bf16.msra.mxu0 0
    %799 = vmatprep.subr.bf16.mxu0 0
    %800 = vmatpush1.bf16.msra.mxu0 0
    %801 = vmatprep.subr.bf16.mxu0 0
    %802 = vmatpush1.bf16.msra.mxu0 0
    %803 = vmatprep.mubr.bf16.mxu0 0
    %804 = vmatmul.mubr.bf16.gmra.mrb[0].mxu0 %v769
    %v805 = vpop.f32.mrb[0].mxu0
    %v806 = vadd.f32 %v752, %v805
    %v807 = vpop.f32.mrb[0].mxu0
    %v808 = vpop.f32.mrb[0].mxu0
    %v809 = vpop.f32.mrb[0].mxu0
    %810 = vdwg.mxu0
    %vm811 = vcmask 31744
    %v812 = vsel %vm811, %v806, -inf
    %813 = vmax.xlane.f32.xlu0 %v812
    %v814 = vpop.xlane.xlu0 %813
    %v815 = vsub.f32 %v806, %v814
    %v816 = vmul.f32 %v815, 1.442695
    %v817 = vpow.pop %v816
    %v818 = vsel %vm811, %v817, 0.0
    %819 = vadd.xlane.f32.xlu0 %v818
    %v820 = vpop.xlane.xlu0 %819
    %v821 = vlog2.pop %v820
    %v822 = vmul.f32 %v821, 0.6931472
    %v823 = vadd.f32 %v822, %v814
    %v824 = vsub.f32 %v806, %v823
    %v825 = vld [vmem:[%s4] sm:$0xff]
    %v826 = vmul.f32 %v825, %v824
    %v827 = vsel %vm811, %v826, 0.0
    %828 = vadd.xlane.f32.xlu0 %v827
    %v829 = vpop.xlane.xlu0 %828
    %v830 = vrot.slane %v829, 4
    %v831 = vadd.f32 %v829, %v830
    %v832 = vrot.slane %v831, 2
    %v833 = vadd.f32 %v831, %v832
    %v834 = vrot.slane %v833, 1
    %v835 = vadd.f32 %v833, %v834
    %s836 = vtos %v835
    %s837 = ssub.f32 0.0, %s836
    %s838 = smul.f32 %s837, 0.5
    %s839 = scalar_lea.smem [#allocation2], 0
    %840 = sst [smem:[%s839]] %s838
    // Predicated region
    $region22: #{tpu_custom_call.1} parent=1 // pred_check
      _
    $region23: #{tpu_custom_call.1} parent=1 // pred_check_branch
      %842 = sbr.rel (0) target = $region25
    $region24: #{tpu_custom_call.1} parent=1 // pred_region
      %s844 = ssub.s32 16, 16
      %845 = vsyncadd [#allocation3], %s844
      %848 = dma.smem_to_hbm [#allocation2], 16, %s5, [#allocation3]
    $region25: #{tpu_custom_call.1} parent=1 // pred_fallthru
      _
    // Predicated region
    $region26: #{tpu_custom_call.1} parent=1 // pred_check
      _
    $region27: #{tpu_custom_call.1} parent=1 // pred_check_branch
      %850 = sbr.rel (0) target = $region29
    $region28: #{tpu_custom_call.1} parent=1 // pred_region
      %851 = dma.done [#allocation3], 16
    $region29: #{tpu_custom_call.1} parent=1 // pred_fallthru
      _
    %852 = sfence
    %853 = vsyncpa [#allocation3], 1

</llo_original>
